<compile_context>
chip_gen: v7x
topology: tpu7x:2x2x1
jax: 0.10.0
libtpu: 0.0.40
codegen_flags: <defaults>
</compile_context>

<pallas_src>
import functools

import jax
import jax.numpy as jnp
from jax.experimental import pallas as pl
from jax.experimental.pallas import tpu as pltpu

SCALE = 1.0
LOGSCALE_FACTOR = 3.0
EPS = 1e-6


def _vmem_budget_bytes():
    """Usable scoped-VMEM budget for this chip generation (~75% of physical)."""
    try:
        cap = int(pltpu.get_tpu_info().vmem_capacity_bytes)
    except Exception:
        cap = 64 * 2**20  # conservative (v7x) fallback
    return max(32 * 2**20, int(cap * 3 // 4))


def _choose_tile_hw(hw, row_bytes, slab_cap_bytes):
    """Lane tile: full hw if it fits under the slab cap, else the largest 128-multiple
    divisor of hw under the cap, else a 128-multiple cap with a ragged (masked) tail."""
    max_lanes = max(128, (slab_cap_bytes // max(row_bytes, 1)) // 128 * 128)
    if hw <= max_lanes:
        return hw, False
    for t in range(max_lanes, 127, -128):
        if hw % t == 0:
            return t, False
    return max_lanes, True


def _stats_kernel(hw, tile_hw, ragged, x_ref, sum_ref, sumsq_ref):
    # x_ref: (rows, tile_hw) f32 block; sum_ref/sumsq_ref: (1, rows, 1) accumulator outputs.
    t = pl.program_id(1)

    @pl.when(t == 0)
    def _init():
        sum_ref[...] = jnp.zeros_like(sum_ref)
        sumsq_ref[...] = jnp.zeros_like(sumsq_ref)

    x = x_ref[...]
    if ragged:
        # Last tile may extend past hw; zero out-of-range lanes before reducing.
        tile_idx = pl.program_id(0) * pl.num_programs(1) + t
        lane = jax.lax.broadcasted_iota(jnp.int32, x.shape, 1)
        x = jnp.where(tile_idx * tile_hw + lane < hw, x, 0.0)

    # Per-tile cross-lane reduce (XLU) into tiny (rows, 1) accumulators — no full-width
    # scratch slabs, so no extra full-width loads/stores competing with the input DMA.
    sum_ref[...] += jnp.sum(x, axis=-1, keepdims=True)[None]
    sumsq_ref[...] += jnp.sum(x * x, axis=-1, keepdims=True)[None]


def _apply_kernel(x_ref, bias_ref, scale_ref, y_ref):
    # x_ref/y_ref: (rows, tile_hw); bias_ref/scale_ref: (rows, 1) broadcast over lanes.
    y_ref[...] = (x_ref[...] + bias_ref[...]) * scale_ref[...]


def actnorm_forward(x_nchw, logdet):
    """x_nchw: (N, C, H, W) float32, logdet: scalar float32.
    Returns (y_nchw, logdet_out) matching ActNorm.forward(x, logdet, reverse=False)
    in training mode (data-dependent initialization of bias/logs)."""
    N, C, H, W = x_nchw.shape
    hw = H * W
    rows = N * C
    nhw = N * hw

    x2d = x_nchw.astype(jnp.float32).reshape(rows, hw)  # free reshape, no transpose

    budget = _vmem_budget_bytes()
    rows_pad = -(-rows // 8) * 8
    # Apply pass holds 4 slab buffers (double-buffered input + output); keep headroom.
    slab_cap = max(512 * 1024, (budget - 4 * 2**20) // 4)
    tile_hw, ragged = _choose_tile_hw(hw, rows_pad * 4, slab_cap)
    n_tiles = pl.cdiv(hw, tile_hw)

    # Two independent partial-sum groups so v7x's two TensorCores can split the stats
    # pass; harmless (sequential, tiny extra output) on single-TC v5e/v6e.
    n_groups = 2 if (n_tiles % 2 == 0 and n_tiles >= 2) else 1
    tiles_per_group = n_tiles // n_groups

    # ---- Phase 1: streaming stats pass -> per-row partial sums ----
    sums, sumsqs = pl.pallas_call(
        functools.partial(_stats_kernel, hw, tile_hw, ragged),
        grid=(n_groups, tiles_per_group),
        in_specs=[
            pl.BlockSpec((rows, tile_hw),
                         lambda p, t: (0, p * tiles_per_group + t)),
        ],
        out_specs=(
            pl.BlockSpec((1, rows, 1), lambda p, t: (p, 0, 0)),
            pl.BlockSpec((1, rows, 1), lambda p, t: (p, 0, 0)),
        ),
        out_shape=(
            jax.ShapeDtypeStruct((n_groups, rows, 1), jnp.float32),
            jax.ShapeDtypeStruct((n_groups, rows, 1), jnp.float32),
        ),
        compiler_params=pltpu.CompilerParams(
            dimension_semantics=("parallel", "arbitrary"),
            vmem_limit_bytes=budget,
        ),
    )(x2d)

    # ---- Finalize (O(N*C) work in plain JAX): combine partials, bias/scale, logdet ----
    row_sum = jnp.sum(sums, axis=0).reshape(N, C)
    row_sumsq = jnp.sum(sumsqs, axis=0).reshape(N, C)
    mean = jnp.sum(row_sum, axis=0) / nhw                        # (C,)
    # mean(xc^2) = E[x^2] - mean^2 ; clamp tiny negative f32 cancellation.
    var = jnp.maximum(jnp.sum(row_sumsq, axis=0) / nhw - mean * mean, 0.0)
    logs_eff = jnp.log(SCALE / (jnp.sqrt(var) + EPS))            # = logs * logscale_factor
    bias_c = -mean
    scale_c = jnp.exp(logs_eff)
    logdet_out = jnp.asarray(logdet, jnp.float32) + jnp.sum(logs_eff) * hw

    # Per-row (N*C, 1) bias/scale so phase 2 broadcasts straight over lanes.
    bias_rows = jnp.broadcast_to(bias_c[None, :], (N, C)).reshape(rows, 1)
    scale_rows = jnp.broadcast_to(scale_c[None, :], (N, C)).reshape(rows, 1)

    # ---- Phase 2: streaming apply, fully parallel grid ----
    y2d = pl.pallas_call(
        _apply_kernel,
        grid=(n_tiles,),
        in_specs=[
            pl.BlockSpec((rows, tile_hw), lambda t: (0, t)),
            pl.BlockSpec((rows, 1), lambda t: (0, 0)),
            pl.BlockSpec((rows, 1), lambda t: (0, 0)),
        ],
        out_specs=pl.BlockSpec((rows, tile_hw), lambda t: (0, t)),
        out_shape=jax.ShapeDtypeStruct((rows, hw), jnp.float32),
        compiler_params=pltpu.CompilerParams(
            dimension_semantics=("parallel",),
            vmem_limit_bytes=budget,
        ),
    )(x2d, bias_rows, scale_rows)

    return y2d.reshape(N, C, H, W), logdet_out


def _reference_forward(x, logdet):
    # Pure-JAX reference mirroring the PyTorch module (training mode, reverse=False).
    bias = -jnp.mean(x, axis=(0, 2, 3), keepdims=True)
    xc = x + bias
    msq = jnp.mean(xc * xc, axis=(0, 2, 3), keepdims=True)
    logs = jnp.log(SCALE / (jnp.sqrt(msq) + EPS)) / LOGSCALE_FACTOR
    logs_eff = logs * LOGSCALE_FACTOR
    y = xc * jnp.exp(logs_eff)
    dlogdet = jnp.sum(logs_eff) * (x.shape[2] * x.shape[3])
    return y, logdet + dlogdet


if __name__ == "__main__":
    key = jax.random.PRNGKey(0)
    N, C, H, W = 2, 4, 16, 16
    x = jax.random.normal(key, (N, C, H, W), dtype=jnp.float32) * 2.0 + 0.5
    logdet0 = jnp.float32(0.0)

    y, logdet = actnorm_forward(x, logdet0)
    y = jax.block_until_ready(y)
    logdet = jax.block_until_ready(logdet)

    y_ref, logdet_ref = _reference_forward(x, logdet0)
    assert jnp.allclose(y, y_ref, atol=1e-4, rtol=1e-4), "output mismatch"
    assert jnp.allclose(logdet, logdet_ref, atol=1e-3, rtol=1e-5), "logdet mismatch"

    print("KERNEL_OK")
</pallas_src>

<mosaic_0001>
module attributes {stable_mosaic.version = 11 : i64} {
  func.func @_stats_kernel(%arg0: i32, %arg1: i32, %arg2: memref<8x256xf32, #tpu.memory_space<vmem>>, %arg3: memref<1x8x1xf32, #tpu.memory_space<vmem>>, %arg4: memref<1x8x1xf32, #tpu.memory_space<vmem>>) attributes {dimension_semantics = [#tpu.dimension_semantics<parallel>, #tpu.dimension_semantics<arbitrary>], iteration_bounds = array<i64: 1, 1>, scalar_prefetch = 0 : i64, scratch_operands = 0 : i64, tpu.core_type = #tpu.core_type<tc>, window_params = [{transform_indices = @transform_0, window_bounds = array<i64: 8, 256>}, {transform_indices = @transform_1, window_bounds = array<i64: 1, 8, 1>}, {transform_indices = @transform_2, window_bounds = array<i64: 1, 8, 1>}]} {
    %c0_i32 = arith.constant 0 : i32
    %0 = arith.cmpi eq, %arg1, %c0_i32 : i32
    %1 = arith.extui %0 : i1 to i32
    %c0_i32_0 = arith.constant 0 : i32
    %2 = arith.cmpi ne, %1, %c0_i32_0 : i32
    scf.if %2 {
      %cst_15 = arith.constant 0.000000e+00 : f32
      %17 = vector.broadcast %cst_15 : f32 to vector<1x8x1xf32>
      %c0_16 = arith.constant 0 : index
      %c0_17 = arith.constant 0 : index
      %c0_18 = arith.constant 0 : index
      %18 = vector.load %arg3[%c0_16, %c0_17, %c0_18] : memref<1x8x1xf32, #tpu.memory_space<vmem>>, vector<1x8x1xf32>
      tpu.vector_store %arg3[%c0_16, %c0_17, %c0_18], %17 {strides = array<i32>} : memref<1x8x1xf32, #tpu.memory_space<vmem>>, vector<1x8x1xf32>,
      %cst_19 = arith.constant 0.000000e+00 : f32
      %19 = vector.broadcast %cst_19 : f32 to vector<1x8x1xf32>
      %c0_20 = arith.constant 0 : index
      %c0_21 = arith.constant 0 : index
      %c0_22 = arith.constant 0 : index
      %20 = vector.load %arg4[%c0_20, %c0_21, %c0_22] : memref<1x8x1xf32, #tpu.memory_space<vmem>>, vector<1x8x1xf32>
      tpu.vector_store %arg4[%c0_20, %c0_21, %c0_22], %19 {strides = array<i32>} : memref<1x8x1xf32, #tpu.memory_space<vmem>>, vector<1x8x1xf32>,
    } else {
    }
    %c0 = arith.constant 0 : index
    %c0_1 = arith.constant 0 : index
    %3 = vector.load %arg2[%c0, %c0_1] : memref<8x256xf32, #tpu.memory_space<vmem>>, vector<8x256xf32>
    %c0_2 = arith.constant 0 : index
    %c0_3 = arith.constant 0 : index
    %c0_4 = arith.constant 0 : index
    %4 = vector.load %arg3[%c0_2, %c0_3, %c0_4] : memref<1x8x1xf32, #tpu.memory_space<vmem>>, vector<1x8x1xf32>
    %cst = arith.constant dense<0.000000e+00> : vector<8xf32>
    %5 = vector.multi_reduction <add>, %3, %cst [1] : vector<8x256xf32> to vector<8xf32>
    %6 = vector.shape_cast %5 : vector<8xf32> to vector<8x1xf32>
    %7 = vector.shape_cast %6 : vector<8x1xf32> to vector<1x8x1xf32>
    %8 = arith.addf %4, %7 : vector<1x8x1xf32>
    %c0_5 = arith.constant 0 : index
    %c0_6 = arith.constant 0 : index
    %c0_7 = arith.constant 0 : index
    %9 = vector.load %arg3[%c0_5, %c0_6, %c0_7] : memref<1x8x1xf32, #tpu.memory_space<vmem>>, vector<1x8x1xf32>
    tpu.vector_store %arg3[%c0_5, %c0_6, %c0_7], %8 {strides = array<i32>} : memref<1x8x1xf32, #tpu.memory_space<vmem>>, vector<1x8x1xf32>,
    %c0_8 = arith.constant 0 : index
    %c0_9 = arith.constant 0 : index
    %c0_10 = arith.constant 0 : index
    %10 = vector.load %arg4[%c0_8, %c0_9, %c0_10] : memref<1x8x1xf32, #tpu.memory_space<vmem>>, vector<1x8x1xf32>
    %11 = arith.mulf %3, %3 : vector<8x256xf32>
    %cst_11 = arith.constant dense<0.000000e+00> : vector<8xf32>
    %12 = vector.multi_reduction <add>, %11, %cst_11 [1] : vector<8x256xf32> to vector<8xf32>
    %13 = vector.shape_cast %12 : vector<8xf32> to vector<8x1xf32>
    %14 = vector.shape_cast %13 : vector<8x1xf32> to vector<1x8x1xf32>
    %15 = arith.addf %10, %14 : vector<1x8x1xf32>
    %c0_12 = arith.constant 0 : index
    %c0_13 = arith.constant 0 : index
    %c0_14 = arith.constant 0 : index
    %16 = vector.load %arg4[%c0_12, %c0_13, %c0_14] : memref<1x8x1xf32, #tpu.memory_space<vmem>>, vector<1x8x1xf32>
    tpu.vector_store %arg4[%c0_12, %c0_13, %c0_14], %15 {strides = array<i32>} : memref<1x8x1xf32, #tpu.memory_space<vmem>>, vector<1x8x1xf32>,
    return
  }
  func.func @transform_0(%arg0: i32, %arg1: i32) -> (i32, i32) {
    %c1_i32 = arith.constant 1 : i32
    %0 = arith.muli %arg0, %c1_i32 : i32
    %1 = arith.addi %0, %arg1 : i32
    %c0_i32 = arith.constant 0 : i32
    %c0_i32_0 = arith.constant 0 : i32
    return %c0_i32, %1 : i32, i32
  }
  func.func @transform_1(%arg0: i32, %arg1: i32) -> (i32, i32, i32) {
    %c0_i32 = arith.constant 0 : i32
    %c0_i32_0 = arith.constant 0 : i32
    %c0_i32_1 = arith.constant 0 : i32
    return %arg0, %c0_i32, %c0_i32_0 : i32, i32, i32
  }
  func.func @transform_2(%arg0: i32, %arg1: i32) -> (i32, i32, i32) {
    %c0_i32 = arith.constant 0 : i32
    %c0_i32_0 = arith.constant 0 : i32
    %c0_i32_1 = arith.constant 0 : i32
    return %arg0, %c0_i32, %c0_i32_0 : i32, i32, i32
  }
}

</mosaic_0001>

<llo_original>
// kernel: tpu_custom_call.1
$region0: #{tpu_custom_call.1}
  #allocation0 [shape = 'u32[]', space=smem, size = 0x4, offset = 0x4, fixed_abs, tag = 'smem constant byte address 0x4 - core index']
  #allocation1 [shape = 'u32[144,128]{1,0:T(1,128)}', space=vmem, size = 0x12000, scoped, tag = 'internal scratch']
  %s0 = inlined_call_operand.hbm [shape: f32[8,256], index: 0, kind: input, shape index: {}]
  %s1 = inlined_call_operand.vmem [shape: f32[1,8,1], index: 1, kind: output, shape index: {0}]
  %s2 = inlined_call_operand.vmem [shape: f32[1,8,1], index: 2, kind: output, shape index: {1}]
  %3 = xla_tuple %s1, %s2
  %s4 = sld [smem:[#allocation0]]
  $region30: #{tpu_custom_call.1} parent=0
    _
  %s6 = ssub.s32 1, %s4
  %s7 = scalar_select 0, %s6, %s4
  $region1: #{tpu_custom_call.1} parent=0
    #allocation2 [shape = 'u8[8192]{0}', space=vmem, size = 0x2000, scoped, tag = 'input window, operand 0, single buffered']
    #allocation3 [shape = 's32[1]{0}', space=sflag, size = 0x4, scoped, tag = 'scoped memory for tpu_custom_call.1']
    %8 = vsyncpa [#allocation3], 0
    // Predicated region
    $region2: #{tpu_custom_call.1} parent=1 // pred_check
      _
    $region3: #{tpu_custom_call.1} parent=1 // pred_check_branch
      %10 = sbr.rel (0) target = $region5
    $region4: #{tpu_custom_call.1} parent=1 // pred_region
      %s11 = sadd.s32 0, 0
      %s12 = smul.u32 2, %s11
      %s14 = ssub.s32 256, 256
      %15 = vsyncadd [#allocation3], %s14
      %s16 = smul.addr %s12, 128
      %s17 = scalar_lea.hbm %s0, %s16
      %s19 = sshll.u32 [#allocation2], 4
      %s20 = int_to_ptr.vmem [resolvable:$true] %s19
      %22 = dma.hbm_to_vmem [thread:$0]  %s17, 256, %s20, [#allocation3]
    $region5: #{tpu_custom_call.1} parent=1 // pred_fallthru
      _
    // Predicated region
    $region6: #{tpu_custom_call.1} parent=1 // pred_check
      _
    $region7: #{tpu_custom_call.1} parent=1 // pred_check_branch
      %24 = sbr.rel (0) target = $region9
    $region8: #{tpu_custom_call.1} parent=1 // pred_region
      %25 = dma.done [#allocation3], 256
    $region9: #{tpu_custom_call.1} parent=1 // pred_fallthru
      _
    %s26 = sadd.s32 0, 0
    %s27 = smul.u32 2, %s26
    %p28 = scmp.eq.s32.totalorder 0, 0
    // Predicated region
    $region10: #{tpu_custom_call.1} parent=1 // pred_check
      %p29 = pneg %p28
    $region11: #{tpu_custom_call.1} parent=1 // pred_check_branch
      %31 = sbr.rel (%p29) target = $region13
    $region12: #{tpu_custom_call.1} parent=1 // pred_region
      %vm32 = vcmask 7168
      %33 = vst.msk [vmem:[%s1] sm:$0xff] %vm32, 0.0
      %34 = vst.msk [vmem:[%s2] sm:$0xff] %vm32, 0.0
    $region13: #{tpu_custom_call.1} parent=1 // pred_fallthru
      _
    %v35 = vld [vmem:[#allocation2] sm:$0xff]
    %v36 = vld [vmem:[#allocation2 + $0x8] sm:$0xff]
    %v37 = vld [vmem:[%s1] sm:$0xff]
    %v38 = vadd.f32 %v35, %v36
    %39 = vadd.xlane.f32.xlu0 %v38
    %v40 = vpop.xlane.xlu0 %39
    %v41 = vadd.f32 %v37, %v40
    %vm42 = vcmask 7168
    %43 = vst.msk [vmem:[%s1] sm:$0xff] %vm42, %v41
    %v44 = vld [vmem:[%s2] sm:$0xff]
    %v45 = vmul.f32 %v35, %v35
    %v46 = vmul.f32 %v36, %v36
    %v47 = vadd.f32 %v45, %v46
    %48 = vadd.xlane.f32.xlu0 %v47
    %v49 = vpop.xlane.xlu0 %48
    %v50 = vadd.f32 %v44, %v49
    %51 = vst.msk [vmem:[%s2] sm:$0xff] %vm42, %v50
    // Predicated region
    $region14: #{tpu_custom_call.1} parent=1 // pred_check
      _
    $region15: #{tpu_custom_call.1} parent=1 // pred_check_branch
      %53 = sbr.rel (0) target = $region17
    $region16: #{tpu_custom_call.1} parent=1 // pred_region
      _
    $region17: #{tpu_custom_call.1} parent=1 // pred_fallthru
      _
    // Predicated region
    $region18: #{tpu_custom_call.1} parent=1 // pred_check
      _
    $region19: #{tpu_custom_call.1} parent=1 // pred_check_branch
      %55 = sbr.rel (0) target = $region21
    $region20: #{tpu_custom_call.1} parent=1 // pred_region
      _
    $region21: #{tpu_custom_call.1} parent=1 // pred_fallthru
      _
    // Predicated region
    $region22: #{tpu_custom_call.1} parent=1 // pred_check
      _
    $region23: #{tpu_custom_call.1} parent=1 // pred_check_branch
      %57 = sbr.rel (0) target = $region25
    $region24: #{tpu_custom_call.1} parent=1 // pred_region
      _
    $region25: #{tpu_custom_call.1} parent=1 // pred_fallthru
      _
    // Predicated region
    $region26: #{tpu_custom_call.1} parent=1 // pred_check
      _
    $region27: #{tpu_custom_call.1} parent=1 // pred_check_branch
      %59 = sbr.rel (0) target = $region29
    $region28: #{tpu_custom_call.1} parent=1 // pred_region
      _
    $region29: #{tpu_custom_call.1} parent=1 // pred_fallthru
      _
    %60 = vsyncpa [#allocation3], 1

</llo_original>
